<compile_context>
chip_gen: v5e
topology: v5e:2x2
jax: 0.10.0
libtpu: 0.0.40
codegen_flags: <defaults>
</compile_context>

<pallas_src>
import jax
import jax.numpy as jnp
from jax.experimental import pallas as pl
from jax.experimental.pallas import tpu as pltpu

_LANE = 128
_SUBLANE = 8


def _round_up(x, m):
    return ((x + m - 1) // m) * m


def _pick_tiles(B, T, H, itemsize, x_block_budget=8 << 20):
    # Batch tile: multiple of the sublane (8), capped at 128, sized so the
    # batch grid has >= 2 tiles whenever possible (v7x has 2 TensorCores and
    # the "parallel" batch axis is the only thing that shards across them).
    if B <= _SUBLANE:
        bm = B
    else:
        bm = max(_SUBLANE, min(128, _round_up(pl.cdiv(B, 2), _SUBLANE)))
    # If even a tt=8 slab would blow the budget (huge H), shrink bm first.
    while bm > _SUBLANE and bm * _SUBLANE * H * itemsize > x_block_budget:
        bm = max(_SUBLANE, bm // 2)

    # Sequence tile: biggest multiple of 8 (or all of T) that keeps one
    # (bm, tt, H) block around the budget -> big DMAs, few grid steps.
    tt_cap = x_block_budget // max(1, bm * H * itemsize)
    if tt_cap >= T:
        tt = T
    else:
        tt = max(_SUBLANE, (tt_cap // _SUBLANE) * _SUBLANE)
    return bm, tt


def _make_kernel(T, tt):
    mask_tail = (T % tt) != 0  # static: only emit masking code when needed

    def kernel(x_ref, w_ref, o_ref, acc_ref):
        # x_ref: (bm, tt, H) feature tile, w_ref: (H, Lp) scaled weight (f32),
        # o_ref: (bm, Lp) output tile, acc_ref: (bm, H) f32 running sum.
        t = pl.program_id(1)

        @pl.when(t == 0)
        def _():
            acc_ref[...] = jnp.zeros_like(acc_ref)

        xv = x_ref[...].astype(jnp.float32)
        if mask_tail:
            # Zero out sequence positions past the true length T (only the
            # last T tile is ragged; full tiles select everything).
            rem = T - t * tt
            pos = jax.lax.broadcasted_iota(jnp.int32, (1, tt, 1), 1)
            xv = jnp.where(pos < rem, xv, 0.0)
        acc_ref[...] += xv.sum(axis=1)

        @pl.when(t == pl.num_programs(1) - 1)
        def _():
            # One MXU matmul per batch tile; 1/T is pre-folded into w_ref, so
            # sum @ (W.T / T) == mean @ W.T.
            o_ref[...] = jnp.dot(
                acc_ref[...], w_ref[...], preferred_element_type=jnp.float32
            ).astype(o_ref.dtype)

    return kernel


def gpt2_avgpool_classification_head(features, weight, sequence_lengths=None,
                                     *, bm=None, tt=None, buffers=2):
    """features: (B, T, H); weight: (L, H) (PyTorch Linear layout). Returns (B, L).

    sequence_lengths is accepted for parity with the PyTorch forward signature
    but, exactly like the reference module, it is ignored (mean over full T).
    """
    del sequence_lengths  # the reference module ignores it too
    B, T, H = features.shape
    L, H_w = weight.shape
    assert H_w == H, "weight must be (num_labels, n_embd)"
    out_dtype = features.dtype
    itemsize = jnp.dtype(features.dtype).itemsize

    # Fold 1/T into the transposed weight; pad num_labels up to a lane-dense
    # multiple of 128 so the output store is unmasked.  (The weight is tiny,
    # so this pad is negligible; the big features tensor is NOT padded.)
    Lp = _round_up(L, _LANE)
    w_t = weight.astype(jnp.float32).T * (1.0 / T)             # (H, L)
    if Lp != L:
        w_t = jnp.pad(w_t, ((0, 0), (0, Lp - L)))               # (H, Lp)

    auto_bm, auto_tt = _pick_tiles(B, T, H, itemsize)
    bm = auto_bm if bm is None else min(bm, B)
    tt = auto_tt if tt is None else min(tt, T)

    grid = (pl.cdiv(B, bm), pl.cdiv(T, tt))

    x_spec_kwargs = {}
    if buffers != 2:
        # Optional deeper pipelining if the DMA is still exposed (small H).
        x_spec_kwargs["pipeline_mode"] = pl.Buffered(buffers)
    x_spec = pl.BlockSpec((bm, tt, H), lambda b, t: (b, t, 0), **x_spec_kwargs)

    # Raise the scoped-VMEM limit to comfortably cover the chosen blocks
    # (the auto-tiled path stays far below v7x's 64 MiB physical VMEM).
    x_blk = bm * tt * H * itemsize
    est_vmem = (max(2, buffers) * x_blk                 # pipelined feature buffers
                + 2 * H * Lp * 4                        # VMEM-resident weight
                + bm * H * 4                            # f32 accumulator scratch
                + 2 * bm * Lp * jnp.dtype(out_dtype).itemsize)
    vmem_limit = int(min(96 << 20, max(32 << 20, int(est_vmem * 1.25))))

    out = pl.pallas_call(
        _make_kernel(T, tt),
        out_shape=jax.ShapeDtypeStruct((B, Lp), out_dtype),
        grid_spec=pltpu.PrefetchScalarGridSpec(
            num_scalar_prefetch=0,
            grid=grid,
            in_specs=[
                # Stream feature tiles over (batch, sequence).
                x_spec,
                # Weight is tiny; constant index_map keeps it VMEM-resident.
                pl.BlockSpec((H, Lp), lambda b, t: (0, 0)),
            ],
            out_specs=pl.BlockSpec((bm, Lp), lambda b, t: (b, 0)),
            scratch_shapes=[pltpu.VMEM((bm, H), jnp.float32)],
        ),
        compiler_params=pltpu.CompilerParams(
            dimension_semantics=("parallel", "arbitrary"),
            vmem_limit_bytes=vmem_limit),
    )(features, w_t)

    # Slice away label-lane padding.
    return out[:, :L]


if __name__ == "__main__":
    # Small config consistent with the module: n_embd=32, num_labels=4.
    B, T, H, L = 2, 8, 32, 4

    key = jax.random.PRNGKey(0)
    k_feat, k_w = jax.random.split(key)

    features = jax.random.normal(k_feat, (B, T, H), dtype=jnp.float32)
    # Deterministic init of the Linear weight (num_labels, n_embd), no bias.
    weight = jax.random.normal(k_w, (L, H), dtype=jnp.float32) * 0.02
    # Accepted (and ignored) just like the PyTorch forward.
    sequence_lengths = jnp.full((B,), T, dtype=jnp.int32)

    out = gpt2_avgpool_classification_head(features, weight, sequence_lengths)
    out = jax.block_until_ready(out)

    ref = jnp.mean(features, axis=1) @ weight.T
    assert out.shape == (B, L)
    assert jnp.allclose(out, ref, atol=1e-5, rtol=1e-5)

    # Larger ragged shape: auto-tiled path (partial last batch tile, tt == T).
    B2, T2, H2, L2 = 10, 200, 128, 4
    k_feat2, k_w2 = jax.random.split(jax.random.PRNGKey(1))
    features2 = jax.random.normal(k_feat2, (B2, T2, H2), dtype=jnp.float32)
    weight2 = jax.random.normal(k_w2, (L2, H2), dtype=jnp.float32) * 0.02
    out2 = jax.block_until_ready(
        gpt2_avgpool_classification_head(features2, weight2))
    ref2 = jnp.mean(features2, axis=1) @ weight2.T
    assert out2.shape == (B2, L2)
    assert jnp.allclose(out2, ref2, atol=1e-4, rtol=1e-4)

    # Same data with explicit small tiles to exercise the in-kernel ragged-T
    # masking (200 = 3*64 + 8) and the multi-step reduction over T.
    out3 = jax.block_until_ready(
        gpt2_avgpool_classification_head(features2, weight2, bm=8, tt=64))
    assert jnp.allclose(out3, ref2, atol=1e-4, rtol=1e-4)

    print("KERNEL_OK")
</pallas_src>

<mosaic_0001>
module attributes {stable_mosaic.version = 11 : i64} {
  func.func @kernel(%arg0: i32, %arg1: i32, %arg2: memref<2x8x32xf32, #tpu.memory_space<vmem>>, %arg3: memref<32x128xf32, #tpu.memory_space<vmem>>, %arg4: memref<2x128xf32, #tpu.memory_space<vmem>>, %arg5: memref<2x32xf32, #tpu.memory_space<vmem>>) attributes {dimension_semantics = [#tpu.dimension_semantics<parallel>, #tpu.dimension_semantics<arbitrary>], iteration_bounds = array<i64: 1, 1>, scalar_prefetch = 0 : i64, scratch_operands = 1 : i64, tpu.core_type = #tpu.core_type<tc>, window_params = [{transform_indices = @transform_0, window_bounds = array<i64: 2, 8, 32>}, {pipeline_mode = #tpu.pipeline_mode<synchronous>, transform_indices = @transform_1, window_bounds = array<i64: 32, 128>}, {transform_indices = @transform_2, window_bounds = array<i64: 2, 128>}]} {
    %c0_i32 = arith.constant 0 : i32
    %0 = arith.cmpi eq, %arg1, %c0_i32 : i32
    %1 = arith.extui %0 : i1 to i32
    %c0_i32_0 = arith.constant 0 : i32
    %2 = arith.cmpi ne, %1, %c0_i32_0 : i32
    scf.if %2 {
      %cst_9 = arith.constant 0.000000e+00 : f32
      %11 = vector.broadcast %cst_9 : f32 to vector<2x32xf32>
      %c0_10 = arith.constant 0 : index
      %c0_11 = arith.constant 0 : index
      %12 = vector.load %arg5[%c0_10, %c0_11] : memref<2x32xf32, #tpu.memory_space<vmem>>, vector<2x32xf32>
      tpu.vector_store %arg5[%c0_10, %c0_11], %11 {strides = array<i32>} : memref<2x32xf32, #tpu.memory_space<vmem>>, vector<2x32xf32>,
    } else {
    }
    %c0 = arith.constant 0 : index
    %c0_1 = arith.constant 0 : index
    %c0_2 = arith.constant 0 : index
    %3 = vector.load %arg2[%c0, %c0_1, %c0_2] : memref<2x8x32xf32, #tpu.memory_space<vmem>>, vector<2x8x32xf32>
    %c0_3 = arith.constant 0 : index
    %c0_4 = arith.constant 0 : index
    %4 = vector.load %arg5[%c0_3, %c0_4] : memref<2x32xf32, #tpu.memory_space<vmem>>, vector<2x32xf32>
    %cst = arith.constant dense<0.000000e+00> : vector<2x32xf32>
    %5 = vector.multi_reduction <add>, %3, %cst [1] : vector<2x8x32xf32> to vector<2x32xf32>
    %6 = arith.addf %4, %5 : vector<2x32xf32>
    %c0_5 = arith.constant 0 : index
    %c0_6 = arith.constant 0 : index
    %7 = vector.load %arg5[%c0_5, %c0_6] : memref<2x32xf32, #tpu.memory_space<vmem>>, vector<2x32xf32>
    tpu.vector_store %arg5[%c0_5, %c0_6], %6 {strides = array<i32>} : memref<2x32xf32, #tpu.memory_space<vmem>>, vector<2x32xf32>,
    %c0_i32_7 = arith.constant 0 : i32
    %8 = arith.cmpi eq, %arg1, %c0_i32_7 : i32
    %9 = arith.extui %8 : i1 to i32
    %c0_i32_8 = arith.constant 0 : i32
    %10 = arith.cmpi ne, %9, %c0_i32_8 : i32
    scf.if %10 {
      %c0_9 = arith.constant 0 : index
      %c0_10 = arith.constant 0 : index
      %11 = vector.load %arg5[%c0_9, %c0_10] : memref<2x32xf32, #tpu.memory_space<vmem>>, vector<2x32xf32>
      %c0_11 = arith.constant 0 : index
      %c0_12 = arith.constant 0 : index
      %12 = vector.load %arg3[%c0_11, %c0_12] : memref<32x128xf32, #tpu.memory_space<vmem>>, vector<32x128xf32>
      %cst_13 = arith.constant dense<0.000000e+00> : vector<2x128xf32>
      %13 = tpu.matmul %11, %12, %cst_13 {dimension_numbers = #tpu.dot_dimension_numbers<[1], [0], [0], [1], [0, 0, 1, 1], [], []>} : vector<2x32xf32>, vector<32x128xf32>, vector<2x128xf32> -> vector<2x128xf32>
      %c0_14 = arith.constant 0 : index
      %c0_15 = arith.constant 0 : index
      %14 = vector.load %arg4[%c0_14, %c0_15] : memref<2x128xf32, #tpu.memory_space<vmem>>, vector<2x128xf32>
      tpu.vector_store %arg4[%c0_14, %c0_15], %13 {strides = array<i32>} : memref<2x128xf32, #tpu.memory_space<vmem>>, vector<2x128xf32>,
    } else {
    }
    return
  }
  func.func @transform_0(%arg0: i32, %arg1: i32) -> (i32, i32, i32) {
    %c0_i32 = arith.constant 0 : i32
    %c0_i32_0 = arith.constant 0 : i32
    return %arg0, %arg1, %c0_i32 : i32, i32, i32
  }
  func.func @transform_1(%arg0: i32, %arg1: i32) -> (i32, i32) {
    %c0_i32 = arith.constant 0 : i32
    %c0_i32_0 = arith.constant 0 : i32
    %c0_i32_1 = arith.constant 0 : i32
    return %c0_i32, %c0_i32_0 : i32, i32
  }
  func.func @transform_2(%arg0: i32, %arg1: i32) -> (i32, i32) {
    %c0_i32 = arith.constant 0 : i32
    %c0_i32_0 = arith.constant 0 : i32
    return %arg0, %c0_i32 : i32, i32
  }
}

</mosaic_0001>

<llo_original>
// kernel: tpu_custom_call.1
$region0: #{tpu_custom_call.1}
  #allocation0 [shape = 'u32[]', space=smem, size = 0x4, offset = 0x4, fixed_abs, tag = 'smem constant byte address 0x4 - core index']
  #allocation1 [shape = 'u32[72,128]{1,0:T(1,128)}', space=vmem, size = 0x9000, scoped, tag = 'internal scratch']
  #allocation2 [shape = 'f32[2,32]{1,0:T(2,128)}', space=vmem, size = 0x400, scoped, tag = 'scratch operand']
  %s0 = inlined_call_operand.hbm [shape: f32[2,8,32], index: 0, kind: input, shape index: {}]
  %s1 = inlined_call_operand.hbm [shape: f32[32,128], index: 1, kind: input, shape index: {}]
  %s2 = inlined_call_operand.hbm [shape: f32[2,128], index: 2, kind: output, shape index: {}]
  %s3 = sld [smem:[#allocation0]]
  $region34: #{tpu_custom_call.1} parent=0
    _
  %s5 = ssub.s32 1, %s3
  %s6 = scalar_select 0, %s5, %s3
  $region1: #{tpu_custom_call.1} parent=0
    #allocation3 [shape = 'u8[8192]{0}', space=vmem, size = 0x2000, scoped, tag = 'input window, operand 0, single buffered']
    #allocation4 [shape = 's32[1]{0}', space=sflag, size = 0x4, scoped, tag = 'scoped memory for tpu_custom_call.1']
    #allocation5 [shape = 's32[1]{0}', space=sflag, size = 0x4, scoped, tag = 'scoped memory for tpu_custom_call.1']
    #allocation6 [shape = 'u8[16384]{0}', space=vmem, size = 0x4000, scoped, tag = 'input window, operand 1, single buffered']
    #allocation7 [shape = 's32[1]{0}', space=sflag, size = 0x4, scoped, tag = 'scoped memory for tpu_custom_call.1']
    #allocation8 [shape = 'u8[1024]{0}', space=vmem, size = 0x400, scoped, tag = 'output window, operand 0, single buffered']
    %7 = vsyncpa [#allocation4], 0
    %8 = vsyncpa [#allocation7], 0
    %9 = vsyncpa [#allocation5], 0
    // Predicated region
    $region2: #{tpu_custom_call.1} parent=1 // pred_check
      _
    $region3: #{tpu_custom_call.1} parent=1 // pred_check_branch
      %11 = sbr.rel (0) target = $region5
    $region4: #{tpu_custom_call.1} parent=1 // pred_region
      %13 = vsyncadd [#allocation4], 0
      %s14 = sshll.u32 %s0, 4
      %s15 = int_to_ptr.hbm [resolvable:$true] %s14
      %s16 = sshll.u32 [#allocation3], 4
      %s17 = int_to_ptr.vmem [resolvable:$true] %s16
      %22 = dma.hbm_to_vmem [thread:$0]  %s15, 256, %s17, [#allocation4], 128, 128, 8
    $region5: #{tpu_custom_call.1} parent=1 // pred_fallthru
      _
    // Predicated region
    $region6: #{tpu_custom_call.1} parent=1 // pred_check
      _
    $region7: #{tpu_custom_call.1} parent=1 // pred_check_branch
      %24 = sbr.rel (0) target = $region9
    $region8: #{tpu_custom_call.1} parent=1 // pred_region
      %26 = vsyncadd [#allocation7], 0
      %s27 = sshll.u32 %s1, 4
      %s28 = int_to_ptr.hbm [resolvable:$true] %s27
      %s29 = sshll.u32 [#allocation6], 4
      %s30 = int_to_ptr.vmem [resolvable:$true] %s29
      %35 = dma.hbm_to_vmem [thread:$0]  %s28, 512, %s30, [#allocation7], 128, 128, 8
    $region9: #{tpu_custom_call.1} parent=1 // pred_fallthru
      _
    // Predicated region
    $region10: #{tpu_custom_call.1} parent=1 // pred_check
      _
    $region11: #{tpu_custom_call.1} parent=1 // pred_check_branch
      %37 = sbr.rel (0) target = $region13
    $region12: #{tpu_custom_call.1} parent=1 // pred_region
      %39 = dma.done [#allocation4], 256
    $region13: #{tpu_custom_call.1} parent=1 // pred_fallthru
      _
    // Predicated region
    $region14: #{tpu_custom_call.1} parent=1 // pred_check
      _
    $region15: #{tpu_custom_call.1} parent=1 // pred_check_branch
      %41 = sbr.rel (0) target = $region17
    $region16: #{tpu_custom_call.1} parent=1 // pred_region
      %43 = dma.done [#allocation7], 512
    $region17: #{tpu_custom_call.1} parent=1 // pred_fallthru
      _
    %p44 = scmp.eq.s32.totalorder 0, 0
    // Predicated region
    $region18: #{tpu_custom_call.1} parent=1 // pred_check
      %p45 = pneg %p44
    $region19: #{tpu_custom_call.1} parent=1 // pred_check_branch
      %47 = sbr.rel (%p45) target = $region21
    $region20: #{tpu_custom_call.1} parent=1 // pred_region
      %vm48 = vcmask 254976
      %49 = vst.msk [vmem:[#allocation2] sm:$0x3] %vm48, 0.0
    $region21: #{tpu_custom_call.1} parent=1 // pred_fallthru
      _
    %v50 = vld [vmem:[#allocation3] sm:$0xff]
    %v51 = vld [vmem:[#allocation3 + $0x8] sm:$0xff]
    %v52 = vld [vmem:[#allocation2] sm:$0x3]
    %vm53 = vcmask 261120
    %v54 = vsel %vm53, %v50, 0.0
    %v55 = vrot.slane %v54, 4
    %v56 = vadd.f32 %v54, %v55
    %v57 = vrot.slane %v56, 2
    %v58 = vadd.f32 %v56, %v57
    %v59 = vrot.slane %v58, 1
    %v60 = vadd.f32 %v58, %v59
    %v61 = vsel %vm53, %v51, 0.0
    %v62 = vrot.slane %v61, 4
    %v63 = vadd.f32 %v61, %v62
    %v64 = vrot.slane %v63, 2
    %v65 = vadd.f32 %v63, %v64
    %v66 = vrot.slane %v65, 1
    %v67 = vadd.f32 %v65, %v66
    %vm70 = vcmask 1041409
    %v71 = vsel %vm70, %v67, %v60
    %v73 = vadd.f32 %v52, %v71
    %vm74 = vcmask 254976
    %75 = vst.msk [vmem:[#allocation2] sm:$0x3] %vm74, %v73
    // Predicated region
    $region22: #{tpu_custom_call.1} parent=1 // pred_check
      %p76 = pneg %p44
    $region23: #{tpu_custom_call.1} parent=1 // pred_check_branch
      %78 = sbr.rel (%p76) target = $region25
    $region24: #{tpu_custom_call.1} parent=1 // pred_region
      %v79 = vld [vmem:[#allocation2] sm:$0x3]
      %v80 = vld [vmem:[#allocation6] sm:$0xff]
      %v81 = vld [vmem:[#allocation6 + $0x8] sm:$0xff]
      %v82 = vld [vmem:[#allocation6 + $0x10] sm:$0xff]
      %v83 = vld [vmem:[#allocation6 + $0x18] sm:$0xff]
      %v85 = vsel %vm53, %v79, 0
      %87 = vmatpush.msra.mxu0 0.0
      %88 = vmatpush.msra.mxu0 0.0
      %89 = vmatpush.msra.mxu0 0.0
      %90 = vmatpush.msra.mxu0 0.0
      %91 = vmatpush.msra.mxu0 0.0
      %92 = vmatpush.msra.mxu0 0.0
      %93 = vmatpush.msra.mxu0 0.0
      %94 = vmatpush.msra.mxu0 0.0
      %95 = vmatpush.msra.mxu0 0.0
      %96 = vmatpush.msra.mxu0 0.0
      %97 = vmatpush.msra.mxu0 0.0
      %98 = vmatpush.msra.mxu0 0.0
      %99 = vmatpush.msra.mxu0 %v83
      %100 = vmatpush.msra.mxu0 %v82
      %101 = vmatpush.msra.mxu0 %v81
      %102 = vmatpush.msra.mxu0 %v80
      %103 = vmatmul.f32.gmra.mxu0 %v85
      %v104 = vpop.f32.mrf.mxu0
      %v105 = vadd.f32 0.0, %v104
      %106 = vdwg.mxu0
      %107 = vst [vmem:[#allocation8] sm:$0x3] %v105
    $region25: #{tpu_custom_call.1} parent=1 // pred_fallthru
      _
    // Predicated region
    $region26: #{tpu_custom_call.1} parent=1 // pred_check
      _
    $region27: #{tpu_custom_call.1} parent=1 // pred_check_branch
      %109 = sbr.rel (0) target = $region29
    $region28: #{tpu_custom_call.1} parent=1 // pred_region
      %111 = vsyncadd [#allocation5], 0
      %s113 = sshll.u32 [#allocation8], 4
      %s114 = int_to_ptr.vmem [resolvable:$true] %s113
      %s115 = sshll.u32 %s2, 4
      %s116 = int_to_ptr.hbm [resolvable:$true] %s115
      %118 = dma.vmem_to_hbm [thread:$0]  %s114, 32, %s116, [#allocation5]
    $region29: #{tpu_custom_call.1} parent=1 // pred_fallthru
      _
    // Predicated region
    $region30: #{tpu_custom_call.1} parent=1 // pred_check
      _
    $region31: #{tpu_custom_call.1} parent=1 // pred_check_branch
      %120 = sbr.rel (0) target = $region33
    $region32: #{tpu_custom_call.1} parent=1 // pred_region
      %122 = dma.done [#allocation5], 32
    $region33: #{tpu_custom_call.1} parent=1 // pred_fallthru
      _
    %123 = vsyncpa [#allocation4], 1
    %124 = vsyncpa [#allocation7], 1
    %125 = vsyncpa [#allocation5], 1

</llo_original>
